<compile_context>
chip_gen: v7x
topology: tpu7x:2x2x1
jax: 0.10.0
libtpu: 0.0.40
codegen_flags: <defaults>
</compile_context>

<pallas_src>
import jax
import jax.numpy as jnp
from jax.experimental import pallas as pl
from jax.experimental.pallas import tpu as pltpu

_MAX_TM = 512   # rows of patches per step (sublane axis of A / out)
_MAX_TN = 512   # embed columns per step  (lane axis of B / out)


def _round_up(x, m):
    return ((x + m - 1) // m) * m


def _choose_tile(size, align, cap):
    """Pick (tile, padded_size): tile is a multiple of `align`, <= cap, and
    divides padded_size evenly (so the grid has no ragged last block)."""
    padded = _round_up(size, align)
    if padded <= cap:
        return padded, padded
    for t in range(cap, align - 1, -align):
        if padded % t == 0:
            return t, padded
    return cap, _round_up(padded, cap)


def _patch_embed_kernel(a_ref, b_ref, bias_ref, o_ref):
    """One (TM, K) @ (K, TN) MXU matmul, f32 accumulation, bias fused."""
    o_ref[...] = (
        jnp.dot(a_ref[...], b_ref[...], preferred_element_type=jnp.float32)
        + bias_ref[...]
    ).astype(o_ref.dtype)


def patch_embedding_forward(x, weight, bias, patch_size, *,
                            use_pallas=None, compute_dtype=jnp.bfloat16):
    """JAX/Pallas equivalent of PatchEmbedding.forward.

    x      : (B, C, H, W) float32
    weight : (E, C, ps, ps) float32   (nn.Conv2d weight)
    bias   : (E,) float32             (nn.Conv2d bias)
    returns: (B, num_patches, E) float32
    """
    B, C, H, W = x.shape
    E = weight.shape[0]
    ps = patch_size
    Hp, Wp = H // ps, W // ps
    num_patches = Hp * Wp

    M = B * num_patches
    K = C * ps * ps
    N = E

    bias_f32 = jnp.asarray(bias, jnp.float32)

    # Size gate: a single-tile problem is faster through XLA's fused einsum.
    if use_pallas is None:
        use_pallas = (M > _MAX_TM) or (N > _MAX_TN) or (K > 1024)
    if not use_pallas:
        xp = jnp.asarray(x, jnp.float32).reshape(B, C, Hp, ps, Wp, ps)
        out = jnp.einsum("bcipjq,ecpq->bije", xp, jnp.asarray(weight, jnp.float32))
        return out.reshape(B, num_patches, E) + bias_f32[None, None, :]

    # Cast to the (bf16) compute dtype BEFORE the layout pass: halves the HBM
    # traffic of the memory-bound im2col transpose and of the matmul DMA.
    x_c = jnp.asarray(x, compute_dtype)
    w_c = jnp.asarray(weight, compute_dtype)

    # im2col: (B, C, Hp, ps, Wp, ps) -> (B, Hp, Wp, C, ps, ps) -> (M, K).
    # Patch-vector order (c, kh, kw) matches weight.reshape(E, C*ps*ps).
    patches = x_c.reshape(B, C, Hp, ps, Wp, ps)
    patches = patches.transpose(0, 2, 4, 1, 3, 5).reshape(M, K)
    w2d = w_c.reshape(E, K).T  # (K, N)

    # Tile selection. K is kept whole (no K grid axis / no accumulator).
    TM, M_pad = _choose_tile(M, 8, _MAX_TM)
    TN, N_pad = _choose_tile(N, 128, _MAX_TN)

    # Pad only what is needed: A along M (<= TM-1 zero rows), B/bias along N.
    a_pad = patches if M_pad == M else jnp.pad(patches, ((0, M_pad - M), (0, 0)))
    b_pad = w2d if N_pad == N else jnp.pad(w2d, ((0, 0), (0, N_pad - N)))
    bias_pad = jnp.pad(bias_f32, (0, N_pad - N)).reshape(1, N_pad)

    grid = (M_pad // TM, N_pad // TN)

    cost = pl.CostEstimate(
        flops=2 * M_pad * K * N_pad,
        bytes_accessed=(M_pad * K + K * N_pad) * a_pad.dtype.itemsize
        + M_pad * N_pad * 4 + N_pad * 4,
        transcendentals=0,
    )

    out_pad = pl.pallas_call(
        _patch_embed_kernel,
        out_shape=jax.ShapeDtypeStruct((M_pad, N_pad), jnp.float32),
        grid_spec=pltpu.PrefetchScalarGridSpec(
            num_scalar_prefetch=0,
            grid=grid,
            in_specs=[
                pl.BlockSpec((TM, K), lambda i, j: (i, 0)),   # patches tile
                pl.BlockSpec((K, TN), lambda i, j: (0, j)),   # weight tile
                pl.BlockSpec((1, TN), lambda i, j: (0, j)),   # bias tile
            ],
            out_specs=pl.BlockSpec((TM, TN), lambda i, j: (i, j)),
        ),
        compiler_params=pltpu.CompilerParams(
            dimension_semantics=("parallel", "parallel"),
        ),
        cost_estimate=cost,
    )(a_pad, b_pad, bias_pad)

    out = out_pad[:M, :N] if (M_pad != M or N_pad != N) else out_pad
    return out.reshape(B, num_patches, E)


if __name__ == "__main__":
    # Small shapes consistent with the module: img=16, patch=4, C=4, E=32, B=2.
    B, C, IMG, PS, E = 2, 4, 16, 4, 32

    key = jax.random.PRNGKey(0)
    kx, kw, kb = jax.random.split(key, 3)
    x = jax.random.normal(kx, (B, C, IMG, IMG), dtype=jnp.float32)
    weight = jax.random.normal(kw, (E, C, PS, PS), dtype=jnp.float32) * 0.1
    bias = jax.random.normal(kb, (E,), dtype=jnp.float32) * 0.1

    # Force the Pallas path so the kernel is actually exercised at test size.
    out = patch_embedding_forward(x, weight, bias, PS, use_pallas=True)
    out = jax.block_until_ready(out)

    # Pure-jnp f32 reference for the patchify conv + flatten + transpose.
    Hp = Wp = IMG // PS
    xp = x.reshape(B, C, Hp, PS, Wp, PS)
    ref = jnp.einsum("bcipjq,ecpq->bije", xp, weight)
    ref = ref.reshape(B, Hp * Wp, E) + bias[None, None, :]

    assert out.shape == (B, Hp * Wp, E), out.shape
    # bf16 inputs with f32 accumulation: loosened tolerance vs f32 reference.
    assert jnp.allclose(out, ref, atol=5e-2, rtol=5e-2), float(
        jnp.max(jnp.abs(out - ref))
    )

    print("KERNEL_OK")
</pallas_src>

<mosaic_0001>
module attributes {stable_mosaic.version = 11 : i64} {
  func.func @_patch_embed_kernel(%arg0: i32, %arg1: i32, %arg2: memref<32x64xbf16, #tpu.memory_space<vmem>>, %arg3: memref<64x128xbf16, #tpu.memory_space<vmem>>, %arg4: memref<1x128xf32, #tpu.memory_space<vmem>>, %arg5: memref<32x128xf32, #tpu.memory_space<vmem>>) attributes {dimension_semantics = [#tpu.dimension_semantics<parallel>, #tpu.dimension_semantics<parallel>], iteration_bounds = array<i64: 1, 1>, scalar_prefetch = 0 : i64, scratch_operands = 0 : i64, tpu.core_type = #tpu.core_type<tc>, window_params = [{transform_indices = @transform_0, window_bounds = array<i64: 32, 64>}, {transform_indices = @transform_1, window_bounds = array<i64: 64, 128>}, {transform_indices = @transform_2, window_bounds = array<i64: 1, 128>}, {transform_indices = @transform_3, window_bounds = array<i64: 32, 128>}]} {
    %c0 = arith.constant 0 : index
    %c0_0 = arith.constant 0 : index
    %0 = vector.load %arg2[%c0, %c0_0] : memref<32x64xbf16, #tpu.memory_space<vmem>>, vector<32x64xbf16>
    %c0_1 = arith.constant 0 : index
    %c0_2 = arith.constant 0 : index
    %1 = vector.load %arg3[%c0_1, %c0_2] : memref<64x128xbf16, #tpu.memory_space<vmem>>, vector<64x128xbf16>
    %cst = arith.constant dense<0.000000e+00> : vector<32x128xf32>
    %2 = tpu.matmul %0, %1, %cst {dimension_numbers = #tpu.dot_dimension_numbers<[1], [0], [0], [1], [0, 0, 1, 1], [], []>} : vector<32x64xbf16>, vector<64x128xbf16>, vector<32x128xf32> -> vector<32x128xf32>
    %c0_3 = arith.constant 0 : index
    %c0_4 = arith.constant 0 : index
    %3 = vector.load %arg4[%c0_3, %c0_4] : memref<1x128xf32, #tpu.memory_space<vmem>>, vector<1x128xf32>
    %4 = vector.broadcast %3 : vector<1x128xf32> to vector<32x128xf32>
    %5 = arith.addf %2, %4 : vector<32x128xf32>
    %c0_5 = arith.constant 0 : index
    %c0_6 = arith.constant 0 : index
    %6 = vector.load %arg5[%c0_5, %c0_6] : memref<32x128xf32, #tpu.memory_space<vmem>>, vector<32x128xf32>
    tpu.vector_store %arg5[%c0_5, %c0_6], %5 {strides = array<i32>} : memref<32x128xf32, #tpu.memory_space<vmem>>, vector<32x128xf32>,
    return
  }
  func.func @transform_0(%arg0: i32, %arg1: i32) -> (i32, i32) {
    %c0_i32 = arith.constant 0 : i32
    %c0_i32_0 = arith.constant 0 : i32
    return %arg0, %c0_i32 : i32, i32
  }
  func.func @transform_1(%arg0: i32, %arg1: i32) -> (i32, i32) {
    %c0_i32 = arith.constant 0 : i32
    %c0_i32_0 = arith.constant 0 : i32
    return %c0_i32, %arg1 : i32, i32
  }
  func.func @transform_2(%arg0: i32, %arg1: i32) -> (i32, i32) {
    %c0_i32 = arith.constant 0 : i32
    %c0_i32_0 = arith.constant 0 : i32
    return %c0_i32, %arg1 : i32, i32
  }
  func.func @transform_3(%arg0: i32, %arg1: i32) -> (i32, i32) {
    %c0_i32 = arith.constant 0 : i32
    return %arg0, %arg1 : i32, i32
  }
}

</mosaic_0001>

<llo_original>
// kernel: tpu_custom_call.1
$region0: #{tpu_custom_call.1}
  #allocation0 [shape = 'u32[]', space=smem, size = 0x4, offset = 0x4, fixed_abs, tag = 'smem constant byte address 0x4 - core index']
  #allocation1 [shape = 'u32[144,128]{1,0:T(1,128)}', space=vmem, size = 0x12000, scoped, tag = 'internal scratch']
  %s0 = inlined_call_operand.hbm [shape: bf16[32,64], index: 0, kind: input, shape index: {}]
  %s1 = inlined_call_operand.hbm [shape: bf16[64,128], index: 1, kind: input, shape index: {}]
  %s2 = inlined_call_operand.vmem [shape: f32[1,128], index: 2, kind: input, shape index: {}]
  %s3 = inlined_call_operand.hbm [shape: f32[32,128], index: 3, kind: output, shape index: {}]
  %s4 = sld [smem:[#allocation0]]
  $region30: #{tpu_custom_call.1} parent=0
    _
  %s6 = ssub.s32 1, %s4
  %s7 = scalar_select 0, %s6, %s4
  $region1: #{tpu_custom_call.1} parent=0
    #allocation2 [shape = 'u8[8192]{0}', space=vmem, size = 0x2000, scoped, tag = 'input window, operand 0, single buffered']
    #allocation3 [shape = 's32[1]{0}', space=sflag, size = 0x4, scoped, tag = 'scoped memory for tpu_custom_call.1']
    #allocation4 [shape = 's32[1]{0}', space=sflag, size = 0x4, scoped, tag = 'scoped memory for tpu_custom_call.1']
    #allocation5 [shape = 'u8[16384]{0}', space=vmem, size = 0x4000, scoped, tag = 'input window, operand 1, single buffered']
    #allocation6 [shape = 's32[1]{0}', space=sflag, size = 0x4, scoped, tag = 'scoped memory for tpu_custom_call.1']
    #allocation7 [shape = 'u8[16384]{0}', space=vmem, size = 0x4000, scoped, tag = 'output window, operand 0, single buffered']
    %8 = vsyncpa [#allocation3], 0
    %9 = vsyncpa [#allocation6], 0
    %10 = vsyncpa [#allocation4], 0
    // Predicated region
    $region2: #{tpu_custom_call.1} parent=1 // pred_check
      _
    $region3: #{tpu_custom_call.1} parent=1 // pred_check_branch
      %12 = sbr.rel (0) target = $region5
    $region4: #{tpu_custom_call.1} parent=1 // pred_region
      %s14 = ssub.s32 256, 256
      %15 = vsyncadd [#allocation3], %s14
      %s16 = sshll.u32 [#allocation2], 4
      %s17 = int_to_ptr.vmem [resolvable:$true] %s16
      %22 = dma.hbm_to_vmem [thread:$0]  %s0, 256, %s17, [#allocation3], 64, 64, 4
    $region5: #{tpu_custom_call.1} parent=1 // pred_fallthru
      _
    // Predicated region
    $region6: #{tpu_custom_call.1} parent=1 // pred_check
      _
    $region7: #{tpu_custom_call.1} parent=1 // pred_check_branch
      %24 = sbr.rel (0) target = $region9
    $region8: #{tpu_custom_call.1} parent=1 // pred_region
      %s26 = ssub.s32 512, 512
      %27 = vsyncadd [#allocation6], %s26
      %s28 = sshll.u32 [#allocation5], 4
      %s29 = int_to_ptr.vmem [resolvable:$true] %s28
      %34 = dma.hbm_to_vmem [thread:$0]  %s1, 512, %s29, [#allocation6], 64, 64, 4
    $region9: #{tpu_custom_call.1} parent=1 // pred_fallthru
      _
    // Predicated region
    $region10: #{tpu_custom_call.1} parent=1 // pred_check
      _
    $region11: #{tpu_custom_call.1} parent=1 // pred_check_branch
      %36 = sbr.rel (0) target = $region13
    $region12: #{tpu_custom_call.1} parent=1 // pred_region
      _
    $region13: #{tpu_custom_call.1} parent=1 // pred_fallthru
      _
    // Predicated region
    $region14: #{tpu_custom_call.1} parent=1 // pred_check
      _
    $region15: #{tpu_custom_call.1} parent=1 // pred_check_branch
      %38 = sbr.rel (0) target = $region17
    $region16: #{tpu_custom_call.1} parent=1 // pred_region
      %39 = dma.done [#allocation3], 256
    $region17: #{tpu_custom_call.1} parent=1 // pred_fallthru
      _
    // Predicated region
    $region18: #{tpu_custom_call.1} parent=1 // pred_check
      _
    $region19: #{tpu_custom_call.1} parent=1 // pred_check_branch
      %41 = sbr.rel (0) target = $region21
    $region20: #{tpu_custom_call.1} parent=1 // pred_region
      %42 = dma.done [#allocation6], 512
    $region21: #{tpu_custom_call.1} parent=1 // pred_fallthru
      _
    %v44 = vld [vmem:[#allocation2] sm:$0xf]
    %v45 = vld [vmem:[#allocation2 + $0x4] sm:$0xf]
    %v46 = vld [vmem:[#allocation2 + $0x8] sm:$0xf]
    %v47 = vld [vmem:[#allocation2 + $0xc] sm:$0xf]
    %v48 = vld [vmem:[#allocation5] sm:$0xf]
    %v49 = vld [vmem:[#allocation5 + $0x4] sm:$0xf]
    %v50 = vld [vmem:[#allocation5 + $0x8] sm:$0xf]
    %v51 = vld [vmem:[#allocation5 + $0xc] sm:$0xf]
    %v52 = vld [vmem:[#allocation5 + $0x10] sm:$0xf]
    %v53 = vld [vmem:[#allocation5 + $0x14] sm:$0xf]
    %v54 = vld [vmem:[#allocation5 + $0x18] sm:$0xf]
    %v55 = vld [vmem:[#allocation5 + $0x1c] sm:$0xf]
    %v56 = vld [vmem:[%s2] sm:$0x1]
    %v58 = vlaneseq
    %v59 = vshrl.u32 %v58, 7
    %v60 = vsub.s32 0, %v59
    %v61 = vrot.slane %v56, %v60
    %v67 = vunpack.c.l.b16 %v44
    %v68 = vunpack.c.l.b16 %v45
    %v69 = vunpack.c.l.b16 %v46
    %v70 = vunpack.c.l.b16 %v47
    %v71 = vpack.c.b16 %v68, %v67
    %v72 = vpack.c.b16 %v70, %v69
    %v81 = vunpack.c.l.b16 %v48
    %v82 = vunpack.c.l.b16 %v49
    %v83 = vunpack.c.l.b16 %v50
    %v84 = vunpack.c.l.b16 %v51
    %v85 = vunpack.c.l.b16 %v52
    %v86 = vunpack.c.l.b16 %v53
    %v87 = vunpack.c.l.b16 %v54
    %v88 = vunpack.c.l.b16 %v55
    %v89 = vpack.c.b16 %v82, %v81
    %v90 = vpack.c.b16 %v84, %v83
    %v91 = vpack.c.b16 %v86, %v85
    %v92 = vpack.c.b16 %v88, %v87
    %vm97 = vcmask 523264
    %v99 = vsel %vm97, %v71, 0
    %v102 = vsel %vm97, %v72, 0
    %104 = vmatprep.subr.bf16.mxu0 0
    %105 = vmatpush1.bf16.msra.mxu0 %v89
    %106 = vmatprep.subr.bf16.mxu0 0
    %107 = vmatpush1.bf16.msra.mxu0 %v90
    %108 = vmatprep.subr.bf16.mxu0 0
    %109 = vmatpush1.bf16.msra.mxu0 %v91
    %110 = vmatprep.subr.bf16.mxu0 0
    %111 = vmatpush1.bf16.msra.mxu0 %v92
    %112 = vmatprep.subr.bf16.mxu0 0
    %113 = vmatpush1.bf16.msra.mxu0 0
    %114 = vmatprep.subr.bf16.mxu0 0
    %115 = vmatpush1.bf16.msra.mxu0 0
    %116 = vmatprep.subr.bf16.mxu0 0
    %117 = vmatpush1.bf16.msra.mxu0 0
    %118 = vmatprep.subr.bf16.mxu0 0
    %119 = vmatpush1.bf16.msra.mxu0 0
    %120 = vmatprep.subr.bf16.mxu0 0
    %121 = vmatpush1.bf16.msra.mxu0 0
    %122 = vmatprep.subr.bf16.mxu0 0
    %123 = vmatpush1.bf16.msra.mxu0 0
    %124 = vmatprep.subr.bf16.mxu0 0
    %125 = vmatpush1.bf16.msra.mxu0 0
    %126 = vmatprep.subr.bf16.mxu0 0
    %127 = vmatpush1.bf16.msra.mxu0 0
    %128 = vmatprep.subr.bf16.mxu0 0
    %129 = vmatpush1.bf16.msra.mxu0 0
    %130 = vmatprep.subr.bf16.mxu0 0
    %131 = vmatpush1.bf16.msra.mxu0 0
    %132 = vmatprep.subr.bf16.mxu0 0
    %133 = vmatpush1.bf16.msra.mxu0 0
    %134 = vmatprep.subr.bf16.mxu0 0
    %135 = vmatpush1.bf16.msra.mxu0 0
    %136 = vmatprep.mubr.bf16.mxu0 0
    %137 = vmatmul.mubr.bf16.gmra.mrb[0].mxu0 %v99
    %v138 = vpop.f32.mrb[0].mxu0
    %v139 = vadd.f32 %v61, %v138
    %v140 = vpop.f32.mrb[0].mxu0
    %v141 = vpop.f32.mrb[0].mxu0
    %v142 = vadd.f32 %v61, %v141
    %v143 = vpop.f32.mrb[0].mxu0
    %144 = vmatprep.mubr.bf16.mxu0 0
    %145 = vmatmul.mubr.bf16.gmra.mrb[0].mxu0 %v102
    %v146 = vpop.f32.mrb[0].mxu0
    %v147 = vadd.f32 %v61, %v146
    %v148 = vpop.f32.mrb[0].mxu0
    %v149 = vpop.f32.mrb[0].mxu0
    %v150 = vadd.f32 %v61, %v149
    %v151 = vpop.f32.mrb[0].mxu0
    %152 = vdwg.mxu0
    %153 = vst [vmem:[#allocation7] sm:$0xff] %v139
    %154 = vst [vmem:[#allocation7 + $0x8] sm:$0xff] %v142
    %155 = vst [vmem:[#allocation7 + $0x10] sm:$0xff] %v147
    %156 = vst [vmem:[#allocation7 + $0x18] sm:$0xff] %v150
    // Predicated region
    $region22: #{tpu_custom_call.1} parent=1 // pred_check
      _
    $region23: #{tpu_custom_call.1} parent=1 // pred_check_branch
      %158 = sbr.rel (0) target = $region25
    $region24: #{tpu_custom_call.1} parent=1 // pred_region
      %s160 = ssub.s32 512, 512
      %161 = vsyncadd [#allocation4], %s160
      %s162 = sshll.u32 [#allocation7], 4
      %s163 = int_to_ptr.vmem [resolvable:$true] %s162
      %168 = dma.vmem_to_hbm [thread:$0]  %s163, 512, %s3, [#allocation4], 128, 128, 8
    $region25: #{tpu_custom_call.1} parent=1 // pred_fallthru
      _
    // Predicated region
    $region26: #{tpu_custom_call.1} parent=1 // pred_check
      _
    $region27: #{tpu_custom_call.1} parent=1 // pred_check_branch
      %170 = sbr.rel (0) target = $region29
    $region28: #{tpu_custom_call.1} parent=1 // pred_region
      %171 = dma.done [#allocation4], 512
    $region29: #{tpu_custom_call.1} parent=1 // pred_fallthru
      _
    %172 = vsyncpa [#allocation3], 1
    %173 = vsyncpa [#allocation6], 1
    %174 = vsyncpa [#allocation4], 1

</llo_original>
